<compile_context>
chip_gen: v6e
topology: v6e:2x2x1
jax: 0.10.0
libtpu: 0.0.40
codegen_flags: <defaults>
</compile_context>

<pallas_src>
import functools

import numpy as np
import jax
import jax.numpy as jnp
from jax.experimental import pallas as pl
from jax.experimental.pallas import tpu as pltpu


def attention_kernel(x_ref, s1_ref, t1_ref, wpb_ref, wvo_ref, bvo_ref,
                     s2_ref, t2f_ref, wq_ref, bq_ref,
                     out_ref, *, nb, n, h_dim, o_dim):
    x = x_ref[...]                                            # (C_in, nb*n)

    # point_blocks: folded BN + ReLU + k=1 conv as one small-K MXU dot.
    # (bpb is folded into t2f downstream of the max.)
    h = jnp.maximum(x * s1_ref[...] + t1_ref[...], 0.0)
    hblk = jnp.dot(wpb_ref[...], h,
                   preferred_element_type=jnp.float32)        # (H, nb*n)

    # value / out k=1 convs stacked into a single dot over the same x.
    vo = jnp.dot(wvo_ref[...], x,
                 preferred_element_type=jnp.float32) + bvo_ref[...]  # (2O, nb*n)
    v = vo[:o_dim]                                            # value branch
    o = vo[o_dim:]                                            # out   branch

    # --- batched gate chain -------------------------------------------------
    # Gather all per-batch lane-maxima into (H, nb) via mask-accumulation
    # (pure elementwise + lane reductions; no transpose / sublane<->lane
    # relayout).  Iotas are hoisted out of the per-batch loops.
    lane_h = jax.lax.broadcasted_iota(jnp.int32, (h_dim, nb), 1)
    lane_o = jax.lax.broadcasted_iota(jnp.int32, (o_dim, nb), 1)

    m_all = jnp.zeros((h_dim, nb), jnp.float32)
    for b in range(nb):                                       # nb is small & static
        sl = slice(b * n, (b + 1) * n)
        # torch.max(x_, 2, keepdim=True)[0] -> lane reduction over this batch
        m_col = jnp.max(hblk[:, sl], axis=1, keepdims=True)   # (H, 1)
        m_all = m_all + jnp.where(lane_h == b, m_col, 0.0)    # place in lane b

    # query: folded BN (incl. folded bpb) -> ReLU -> k=1 conv -> sigmoid,
    # amortized once over all nb batches of this chunk (MXU is idle here).
    qi = jnp.maximum(m_all * s2_ref[...] + t2f_ref[...], 0.0)            # (H, nb)
    q = jnp.dot(wq_ref[...], qi,
                preferred_element_type=jnp.float32) + bq_ref[...]        # (O, nb)
    gate = jax.nn.sigmoid(q)                                             # (O, nb)

    # repeat_interleave over points == per-batch lane broadcast of the gate.
    for b in range(nb):
        sl = slice(b * n, (b + 1) * n)
        g_b = jnp.sum(jnp.where(lane_o == b, gate, 0.0),
                      axis=1, keepdims=True)                  # (O, 1)
        out_ref[:, sl] = (g_b * v[:, sl] + o[:, sl]).astype(out_ref.dtype)


def attention_forward(x, params, *, n_batch_chunks=1):
    """x: (B, C_in, N) float32 -> (B, C_out, N) float32.

    n_batch_chunks=1 collapses the whole batch into one lane-dense grid step
    (best on single-TC v5e/v6e at small B); use >=2 on v7x / large B*N so the
    "parallel" batch-chunk axis shards across TensorCores and bounds per-step
    VMEM.
    """
    (s1, t1, wpb, bpb, s2, t2, wq, bq, wv, bv, wo, bo) = params
    B, C_in, N = x.shape
    H = wpb.shape[0]
    O = wq.shape[0]
    assert B % n_batch_chunks == 0, "batch must divide evenly into chunks"
    assert N % 128 == 0, "N must be a multiple of 128 (pad points in wrapper)"
    BC = B // n_batch_chunks

    # Layout plumbing: flatten batch into the lane axis -> lane-dense (C, B*N).
    x_flat = jnp.transpose(x, (1, 0, 2)).reshape(C_in, B * N)

    # Stack value/out convs into one weight; keep point_blocks conv separate.
    w_vo = jnp.concatenate([wv, wo], axis=0)      # (2O, C_in)
    b_vo = jnp.concatenate([bv, bo], axis=0)      # (2O, 1)

    # Fold the point_blocks conv bias through the max into the query BN shift:
    #   max_n(wpb @ h + bpb) = max_n(wpb @ h) + bpb
    #   s2*(m+bpb)+t2 = s2*m + (t2 + s2*bpb)
    s2_col = s2.reshape(H, 1)
    t2f_col = (t2 + s2 * bpb).reshape(H, 1)

    kernel = functools.partial(attention_kernel, nb=BC, n=N, h_dim=H, o_dim=O)

    full2d = lambda a: pl.BlockSpec(a.shape, lambda i: (0, 0))

    grid_spec = pltpu.PrefetchScalarGridSpec(
        num_scalar_prefetch=0,
        grid=(n_batch_chunks,),
        in_specs=[
            pl.BlockSpec((C_in, BC * N), lambda i: (0, i)),
            full2d(s1), full2d(t1), full2d(wpb), full2d(w_vo), full2d(b_vo),
            full2d(s2_col), full2d(t2f_col), full2d(wq), full2d(bq),
        ],
        out_specs=pl.BlockSpec((O, BC * N), lambda i: (0, i)),
    )

    out_flat = pl.pallas_call(
        kernel,
        out_shape=jax.ShapeDtypeStruct((O, B * N), jnp.float32),
        grid_spec=grid_spec,
        compiler_params=pltpu.CompilerParams(
            dimension_semantics=("parallel",)),
    )(x_flat, s1, t1, wpb, w_vo, b_vo, s2_col, t2f_col, wq, bq)

    return out_flat.reshape(O, B, N).transpose(1, 0, 2)


def reference_forward(x, params):
    (s1, t1, wpb, bpb, s2, t2, wq, bq, wv, bv, wo, bo) = params
    h = jnp.maximum(x * s1[None] + t1[None], 0.0)
    h = jnp.einsum('oc,bcn->bon', wpb, h) + bpb[None]
    m = jnp.max(h, axis=2, keepdims=True)
    qi = jnp.maximum(m * s2[None] + t2[None], 0.0)
    q = jnp.einsum('oh,bhn->bon', wq, qi) + bq[None]
    gate = jax.nn.sigmoid(q)
    v = jnp.einsum('oc,bcn->bon', wv, x) + bv[None]
    o = jnp.einsum('oc,bcn->bon', wo, x) + bo[None]
    return gate * v + o


def fold_bn(gamma, beta, mean, var, eps=1e-5):
    scale = gamma / jnp.sqrt(var + eps)
    shift = beta - mean * scale
    return scale[:, None], shift[:, None]


if __name__ == "__main__":
    # Attention(in_channel=8, out_channel=16) -> hidden_dims = 16
    B, C_in, C_out, N = 2, 8, 16, 128
    H = C_out

    key = jax.random.PRNGKey(0)
    ks = jax.random.split(key, 20)

    # BatchNorm1d(in_channel) params (eval-mode, folded)
    g1 = jax.random.normal(ks[0], (C_in,)) * 0.1 + 1.0
    b1 = jax.random.normal(ks[1], (C_in,)) * 0.1
    m1 = jax.random.normal(ks[2], (C_in,)) * 0.1
    v1 = jax.random.uniform(ks[3], (C_in,), minval=0.5, maxval=1.5)
    s1, t1 = fold_bn(g1, b1, m1, v1)

    # Conv1d(in_channel, hidden_dims, 1)
    wpb = jax.random.normal(ks[4], (H, C_in)) * 0.1
    bpb = jax.random.normal(ks[5], (H,))[:, None] * 0.1

    # BatchNorm1d(hidden_dims) params (eval-mode, folded)
    g2 = jax.random.normal(ks[6], (H,)) * 0.1 + 1.0
    b2 = jax.random.normal(ks[7], (H,)) * 0.1
    m2 = jax.random.normal(ks[8], (H,)) * 0.1
    v2 = jax.random.uniform(ks[9], (H,), minval=0.5, maxval=1.5)
    s2, t2 = fold_bn(g2, b2, m2, v2)

    # Conv1d(hidden_dims, out_channel, 1)
    wq = jax.random.normal(ks[10], (C_out, H)) * 0.1
    bq = jax.random.normal(ks[11], (C_out,))[:, None] * 0.1

    # value / out: Conv1d(in_channel, out_channel, 1) (out_channel != in_channel)
    wv = jax.random.normal(ks[12], (C_out, C_in)) * 0.1
    bv = jax.random.normal(ks[13], (C_out,))[:, None] * 0.1
    wo = jax.random.normal(ks[14], (C_out, C_in)) * 0.1
    bo = jax.random.normal(ks[15], (C_out,))[:, None] * 0.1

    params = (s1, t1, wpb, bpb, s2, t2, wq, bq, wv, bv, wo, bo)

    x = jax.random.normal(ks[16], (B, C_in, N), dtype=jnp.float32)

    out = attention_forward(x, params)
    out = jax.block_until_ready(out)

    ref = reference_forward(x, params)
    np.testing.assert_allclose(np.asarray(out), np.asarray(ref),
                               rtol=1e-5, atol=1e-5)
    print("KERNEL_OK")
</pallas_src>

<mosaic_0001>
module attributes {stable_mosaic.version = 11 : i64} {
  func.func @attention_kernel(%arg0: i32, %arg1: memref<8x256xf32, #tpu.memory_space<vmem>>, %arg2: memref<8x1xf32, #tpu.memory_space<vmem>>, %arg3: memref<8x1xf32, #tpu.memory_space<vmem>>, %arg4: memref<16x8xf32, #tpu.memory_space<vmem>>, %arg5: memref<32x8xf32, #tpu.memory_space<vmem>>, %arg6: memref<32x1xf32, #tpu.memory_space<vmem>>, %arg7: memref<16x1xf32, #tpu.memory_space<vmem>>, %arg8: memref<16x1xf32, #tpu.memory_space<vmem>>, %arg9: memref<16x16xf32, #tpu.memory_space<vmem>>, %arg10: memref<16x1xf32, #tpu.memory_space<vmem>>, %arg11: memref<16x256xf32, #tpu.memory_space<vmem>>) attributes {dimension_semantics = [#tpu.dimension_semantics<parallel>], iteration_bounds = array<i64: 1>, scalar_prefetch = 0 : i64, scratch_operands = 0 : i64, tpu.core_type = #tpu.core_type<tc>, window_params = [{transform_indices = @transform_0, window_bounds = array<i64: 8, 256>}, {pipeline_mode = #tpu.pipeline_mode<synchronous>, transform_indices = @transform_1, window_bounds = array<i64: 8, 1>}, {pipeline_mode = #tpu.pipeline_mode<synchronous>, transform_indices = @transform_2, window_bounds = array<i64: 8, 1>}, {pipeline_mode = #tpu.pipeline_mode<synchronous>, transform_indices = @transform_3, window_bounds = array<i64: 16, 8>}, {pipeline_mode = #tpu.pipeline_mode<synchronous>, transform_indices = @transform_4, window_bounds = array<i64: 32, 8>}, {pipeline_mode = #tpu.pipeline_mode<synchronous>, transform_indices = @transform_5, window_bounds = array<i64: 32, 1>}, {pipeline_mode = #tpu.pipeline_mode<synchronous>, transform_indices = @transform_6, window_bounds = array<i64: 16, 1>}, {pipeline_mode = #tpu.pipeline_mode<synchronous>, transform_indices = @transform_7, window_bounds = array<i64: 16, 1>}, {pipeline_mode = #tpu.pipeline_mode<synchronous>, transform_indices = @transform_8, window_bounds = array<i64: 16, 16>}, {pipeline_mode = #tpu.pipeline_mode<synchronous>, transform_indices = @transform_9, window_bounds = array<i64: 16, 1>}, {transform_indices = @transform_10, window_bounds = array<i64: 16, 256>}]} {
    %c0 = arith.constant 0 : index
    %c0_0 = arith.constant 0 : index
    %0 = vector.load %arg1[%c0, %c0_0] : memref<8x256xf32, #tpu.memory_space<vmem>>, vector<8x256xf32>
    %c0_1 = arith.constant 0 : index
    %c0_2 = arith.constant 0 : index
    %1 = vector.load %arg2[%c0_1, %c0_2] : memref<8x1xf32, #tpu.memory_space<vmem>>, vector<8x1xf32>
    %2 = vector.broadcast %1 : vector<8x1xf32> to vector<8x256xf32>
    %3 = arith.mulf %0, %2 : vector<8x256xf32>
    %c0_3 = arith.constant 0 : index
    %c0_4 = arith.constant 0 : index
    %4 = vector.load %arg3[%c0_3, %c0_4] : memref<8x1xf32, #tpu.memory_space<vmem>>, vector<8x1xf32>
    %5 = vector.broadcast %4 : vector<8x1xf32> to vector<8x256xf32>
    %6 = arith.addf %3, %5 : vector<8x256xf32>
    %cst = arith.constant 0.000000e+00 : f32
    %7 = vector.broadcast %cst : f32 to vector<8x256xf32>
    %8 = arith.maximumf %6, %7 : vector<8x256xf32>
    %c0_5 = arith.constant 0 : index
    %c0_6 = arith.constant 0 : index
    %9 = vector.load %arg4[%c0_5, %c0_6] : memref<16x8xf32, #tpu.memory_space<vmem>>, vector<16x8xf32>
    %cst_7 = arith.constant dense<0.000000e+00> : vector<16x256xf32>
    %10 = tpu.matmul %9, %8, %cst_7 {dimension_numbers = #tpu.dot_dimension_numbers<[1], [0], [0], [1], [0, 0, 1, 1], [], []>} : vector<16x8xf32>, vector<8x256xf32>, vector<16x256xf32> -> vector<16x256xf32>
    %c0_8 = arith.constant 0 : index
    %c0_9 = arith.constant 0 : index
    %11 = vector.load %arg5[%c0_8, %c0_9] : memref<32x8xf32, #tpu.memory_space<vmem>>, vector<32x8xf32>
    %cst_10 = arith.constant dense<0.000000e+00> : vector<32x256xf32>
    %12 = tpu.matmul %11, %0, %cst_10 {dimension_numbers = #tpu.dot_dimension_numbers<[1], [0], [0], [1], [0, 0, 1, 1], [], []>} : vector<32x8xf32>, vector<8x256xf32>, vector<32x256xf32> -> vector<32x256xf32>
    %c0_11 = arith.constant 0 : index
    %c0_12 = arith.constant 0 : index
    %13 = vector.load %arg6[%c0_11, %c0_12] : memref<32x1xf32, #tpu.memory_space<vmem>>, vector<32x1xf32>
    %14 = vector.broadcast %13 : vector<32x1xf32> to vector<32x256xf32>
    %15 = arith.addf %12, %14 : vector<32x256xf32>
    %16 = vector.extract_strided_slice %15 {offsets = [0, 0], sizes = [16, 256], strides = [1, 1]} : vector<32x256xf32> to vector<16x256xf32>
    %17 = vector.extract_strided_slice %15 {offsets = [16, 0], sizes = [16, 256], strides = [1, 1]} : vector<32x256xf32> to vector<16x256xf32>
    %18 = tpu.iota {dimensions = array<i32: 1>} : vector<16x2xi32>
    %19 = tpu.iota {dimensions = array<i32: 1>} : vector<16x2xi32>
    %cst_13 = arith.constant 0.000000e+00 : f32
    %20 = vector.broadcast %cst_13 : f32 to vector<16x2xf32>
    %21 = vector.extract_strided_slice %10 {offsets = [0, 0], sizes = [16, 128], strides = [1, 1]} : vector<16x256xf32> to vector<16x128xf32>
    %cst_14 = arith.constant dense<0xFF800000> : vector<16xf32>
    %22 = vector.multi_reduction <maximumf>, %21, %cst_14 [1] : vector<16x128xf32> to vector<16xf32>
    %23 = vector.shape_cast %22 : vector<16xf32> to vector<16x1xf32>
    %c0_i32 = arith.constant 0 : i32
    %24 = vector.broadcast %c0_i32 : i32 to vector<16x2xi32>
    %25 = arith.cmpi eq, %18, %24 : vector<16x2xi32>
    %cst_15 = arith.constant 0.000000e+00 : f32
    %26 = vector.shape_cast %23 : vector<16x1xf32> to vector<16x1xf32>
    %27 = vector.broadcast %26 : vector<16x1xf32> to vector<16x2xf32>
    %28 = vector.broadcast %cst_15 : f32 to vector<16x2xf32>
    %29 = arith.select %25, %27, %28 : vector<16x2xi1>, vector<16x2xf32>
    %30 = arith.addf %20, %29 : vector<16x2xf32>
    %31 = vector.extract_strided_slice %10 {offsets = [0, 128], sizes = [16, 128], strides = [1, 1]} : vector<16x256xf32> to vector<16x128xf32>
    %cst_16 = arith.constant dense<0xFF800000> : vector<16xf32>
    %32 = vector.multi_reduction <maximumf>, %31, %cst_16 [1] : vector<16x128xf32> to vector<16xf32>
    %33 = vector.shape_cast %32 : vector<16xf32> to vector<16x1xf32>
    %c1_i32 = arith.constant 1 : i32
    %34 = vector.broadcast %c1_i32 : i32 to vector<16x2xi32>
    %35 = arith.cmpi eq, %18, %34 : vector<16x2xi32>
    %cst_17 = arith.constant 0.000000e+00 : f32
    %36 = vector.shape_cast %33 : vector<16x1xf32> to vector<16x1xf32>
    %37 = vector.broadcast %36 : vector<16x1xf32> to vector<16x2xf32>
    %38 = vector.broadcast %cst_17 : f32 to vector<16x2xf32>
    %39 = arith.select %35, %37, %38 : vector<16x2xi1>, vector<16x2xf32>
    %40 = arith.addf %30, %39 : vector<16x2xf32>
    %c0_18 = arith.constant 0 : index
    %c0_19 = arith.constant 0 : index
    %41 = vector.load %arg7[%c0_18, %c0_19] : memref<16x1xf32, #tpu.memory_space<vmem>>, vector<16x1xf32>
    %42 = vector.broadcast %41 : vector<16x1xf32> to vector<16x2xf32>
    %43 = arith.mulf %40, %42 : vector<16x2xf32>
    %c0_20 = arith.constant 0 : index
    %c0_21 = arith.constant 0 : index
    %44 = vector.load %arg8[%c0_20, %c0_21] : memref<16x1xf32, #tpu.memory_space<vmem>>, vector<16x1xf32>
    %45 = vector.broadcast %44 : vector<16x1xf32> to vector<16x2xf32>
    %46 = arith.addf %43, %45 : vector<16x2xf32>
    %cst_22 = arith.constant 0.000000e+00 : f32
    %47 = vector.broadcast %cst_22 : f32 to vector<16x2xf32>
    %48 = arith.maximumf %46, %47 : vector<16x2xf32>
    %c0_23 = arith.constant 0 : index
    %c0_24 = arith.constant 0 : index
    %49 = vector.load %arg9[%c0_23, %c0_24] : memref<16x16xf32, #tpu.memory_space<vmem>>, vector<16x16xf32>
    %cst_25 = arith.constant dense<0.000000e+00> : vector<16x2xf32>
    %50 = tpu.matmul %49, %48, %cst_25 {dimension_numbers = #tpu.dot_dimension_numbers<[1], [0], [0], [1], [0, 0, 1, 1], [], []>} : vector<16x16xf32>, vector<16x2xf32>, vector<16x2xf32> -> vector<16x2xf32>
    %c0_26 = arith.constant 0 : index
    %c0_27 = arith.constant 0 : index
    %51 = vector.load %arg10[%c0_26, %c0_27] : memref<16x1xf32, #tpu.memory_space<vmem>>, vector<16x1xf32>
    %52 = vector.broadcast %51 : vector<16x1xf32> to vector<16x2xf32>
    %53 = arith.addf %50, %52 : vector<16x2xf32>
    %54 = arith.negf %53 : vector<16x2xf32>
    %55 = math.exp %54 : vector<16x2xf32>
    %cst_28 = arith.constant 1.000000e+00 : f32
    %56 = vector.broadcast %cst_28 : f32 to vector<16x2xf32>
    %57 = arith.addf %56, %55 : vector<16x2xf32>
    %58 = arith.divf %56, %57 : vector<16x2xf32>
    %c0_i32_29 = arith.constant 0 : i32
    %59 = vector.broadcast %c0_i32_29 : i32 to vector<16x2xi32>
    %60 = arith.cmpi eq, %19, %59 : vector<16x2xi32>
    %cst_30 = arith.constant 0.000000e+00 : f32
    %61 = vector.broadcast %cst_30 : f32 to vector<16x2xf32>
    %62 = arith.select %60, %58, %61 : vector<16x2xi1>, vector<16x2xf32>
    %cst_31 = arith.constant dense<0.000000e+00> : vector<16xf32>
    %63 = vector.multi_reduction <add>, %62, %cst_31 [1] : vector<16x2xf32> to vector<16xf32>
    %64 = vector.shape_cast %63 : vector<16xf32> to vector<16x1xf32>
    %65 = vector.extract_strided_slice %16 {offsets = [0, 0], sizes = [16, 128], strides = [1, 1]} : vector<16x256xf32> to vector<16x128xf32>
    %66 = vector.broadcast %64 : vector<16x1xf32> to vector<16x128xf32>
    %67 = arith.mulf %66, %65 : vector<16x128xf32>
    %68 = vector.extract_strided_slice %17 {offsets = [0, 0], sizes = [16, 128], strides = [1, 1]} : vector<16x256xf32> to vector<16x128xf32>
    %69 = arith.addf %67, %68 : vector<16x128xf32>
    %c0_32 = arith.constant 0 : index
    %c0_33 = arith.constant 0 : index
    %70 = vector.load %arg11[%c0_32, %c0_33] : memref<16x256xf32, #tpu.memory_space<vmem>>, vector<16x128xf32>
    tpu.vector_store %arg11[%c0_32, %c0_33], %69 {strides = array<i32>} : memref<16x256xf32, #tpu.memory_space<vmem>>, vector<16x128xf32>,
    %c1_i32_34 = arith.constant 1 : i32
    %71 = vector.broadcast %c1_i32_34 : i32 to vector<16x2xi32>
    %72 = arith.cmpi eq, %19, %71 : vector<16x2xi32>
    %cst_35 = arith.constant 0.000000e+00 : f32
    %73 = vector.broadcast %cst_35 : f32 to vector<16x2xf32>
    %74 = arith.select %72, %58, %73 : vector<16x2xi1>, vector<16x2xf32>
    %cst_36 = arith.constant dense<0.000000e+00> : vector<16xf32>
    %75 = vector.multi_reduction <add>, %74, %cst_36 [1] : vector<16x2xf32> to vector<16xf32>
    %76 = vector.shape_cast %75 : vector<16xf32> to vector<16x1xf32>
    %77 = vector.extract_strided_slice %16 {offsets = [0, 128], sizes = [16, 128], strides = [1, 1]} : vector<16x256xf32> to vector<16x128xf32>
    %78 = vector.broadcast %76 : vector<16x1xf32> to vector<16x128xf32>
    %79 = arith.mulf %78, %77 : vector<16x128xf32>
    %80 = vector.extract_strided_slice %17 {offsets = [0, 128], sizes = [16, 128], strides = [1, 1]} : vector<16x256xf32> to vector<16x128xf32>
    %81 = arith.addf %79, %80 : vector<16x128xf32>
    %c0_37 = arith.constant 0 : index
    %c128 = arith.constant 128 : index
    %82 = vector.load %arg11[%c0_37, %c128] : memref<16x256xf32, #tpu.memory_space<vmem>>, vector<16x128xf32>
    tpu.vector_store %arg11[%c0_37, %c128], %81 {strides = array<i32>} : memref<16x256xf32, #tpu.memory_space<vmem>>, vector<16x128xf32>,
    return
  }
  func.func @transform_0(%arg0: i32) -> (i32, i32) {
    %c0_i32 = arith.constant 0 : i32
    %c0_i32_0 = arith.constant 0 : i32
    return %c0_i32, %arg0 : i32, i32
  }
  func.func @transform_1(%arg0: i32) -> (i32, i32) {
    %c0_i32 = arith.constant 0 : i32
    %c0_i32_0 = arith.constant 0 : i32
    %c0_i32_1 = arith.constant 0 : i32
    return %c0_i32, %c0_i32_0 : i32, i32
  }
  func.func @transform_2(%arg0: i32) -> (i32, i32) {
    %c0_i32 = arith.constant 0 : i32
    %c0_i32_0 = arith.constant 0 : i32
    %c0_i32_1 = arith.constant 0 : i32
    return %c0_i32, %c0_i32_0 : i32, i32
  }
  func.func @transform_3(%arg0: i32) -> (i32, i32) {
    %c0_i32 = arith.constant 0 : i32
    %c0_i32_0 = arith.constant 0 : i32
    %c0_i32_1 = arith.constant 0 : i32
    return %c0_i32, %c0_i32_0 : i32, i32
  }
  func.func @transform_4(%arg0: i32) -> (i32, i32) {
    %c0_i32 = arith.constant 0 : i32
    %c0_i32_0 = arith.constant 0 : i32
    %c0_i32_1 = arith.constant 0 : i32
    return %c0_i32, %c0_i32_0 : i32, i32
  }
  func.func @transform_5(%arg0: i32) -> (i32, i32) {
    %c0_i32 = arith.constant 0 : i32
    %c0_i32_0 = arith.constant 0 : i32
    %c0_i32_1 = arith.constant 0 : i32
    return %c0_i32, %c0_i32_0 : i32, i32
  }
  func.func @transform_6(%arg0: i32) -> (i32, i32) {
    %c0_i32 = arith.constant 0 : i32
    %c0_i32_0 = arith.constant 0 : i32
    %c0_i32_1 = arith.constant 0 : i32
    return %c0_i32, %c0_i32_0 : i32, i32
  }
  func.func @transform_7(%arg0: i32) -> (i32, i32) {
    %c0_i32 = arith.constant 0 : i32
    %c0_i32_0 = arith.constant 0 : i32
    %c0_i32_1 = arith.constant 0 : i32
    return %c0_i32, %c0_i32_0 : i32, i32
  }
  func.func @transform_8(%arg0: i32) -> (i32, i32) {
    %c0_i32 = arith.constant 0 : i32
    %c0_i32_0 = arith.constant 0 : i32
    %c0_i32_1 = arith.constant 0 : i32
    return %c0_i32, %c0_i32_0 : i32, i32
  }
  func.func @transform_9(%arg0: i32) -> (i32, i32) {
    %c0_i32 = arith.constant 0 : i32
    %c0_i32_0 = arith.constant 0 : i32
    %c0_i32_1 = arith.constant 0 : i32
    return %c0_i32, %c0_i32_0 : i32, i32
  }
  func.func @transform_10(%arg0: i32) -> (i32, i32) {
    %c0_i32 = arith.constant 0 : i32
    %c0_i32_0 = arith.constant 0 : i32
    return %c0_i32, %arg0 : i32, i32
  }
}

</mosaic_0001>

<llo_original>
// kernel: tpu_custom_call.1
$region0: #{tpu_custom_call.1}
  #allocation0 [shape = 'u32[]', space=smem, size = 0x4, offset = 0x4, fixed_abs, tag = 'smem constant byte address 0x4 - core index']
  #allocation1 [shape = 'u32[144,128]{1,0:T(1,128)}', space=vmem, size = 0x12000, scoped, tag = 'internal scratch']
  %s0 = inlined_call_operand.vmem [shape: f32[8,256], index: 0, kind: input, shape index: {}]
  %s1 = inlined_call_operand.vmem [shape: f32[8,1], index: 1, kind: input, shape index: {}]
  %s2 = inlined_call_operand.vmem [shape: f32[8,1], index: 2, kind: input, shape index: {}]
  %s3 = inlined_call_operand.vmem [shape: f32[16,8], index: 3, kind: input, shape index: {}]
  %s4 = inlined_call_operand.vmem [shape: f32[32,8], index: 4, kind: input, shape index: {}]
  %s5 = inlined_call_operand.vmem [shape: f32[32,1], index: 5, kind: input, shape index: {}]
  %s6 = inlined_call_operand.vmem [shape: f32[16,1], index: 6, kind: input, shape index: {}]
  %s7 = inlined_call_operand.vmem [shape: f32[16,1], index: 7, kind: input, shape index: {}]
  %s8 = inlined_call_operand.vmem [shape: f32[16,16], index: 8, kind: input, shape index: {}]
  %s9 = inlined_call_operand.vmem [shape: f32[16,1], index: 9, kind: input, shape index: {}]
  %s10 = inlined_call_operand.hbm [shape: f32[16,256], index: 10, kind: output, shape index: {}]
  %s11 = sld [smem:[#allocation0]]
  $region50: #{tpu_custom_call.1} parent=0
    _
  %s13 = ssub.s32 1, %s11
  %s14 = scalar_select 0, %s13, %s11
  $region1: #{tpu_custom_call.1} parent=0
    #allocation2 [shape = 'u8[16384]{0}', space=vmem, size = 0x4000, scoped, tag = 'output window, operand 0, single buffered']
    #allocation3 [shape = 's32[1]{0}', space=sflag, size = 0x4, scoped, tag = 'scoped memory for tpu_custom_call.1']
    %15 = vsyncpa [#allocation3], 0
    // Predicated region
    $region2: #{tpu_custom_call.1} parent=1 // pred_check
      _
    $region3: #{tpu_custom_call.1} parent=1 // pred_check_branch
      %17 = sbr.rel (0) target = $region5
    $region4: #{tpu_custom_call.1} parent=1 // pred_region
      _
    $region5: #{tpu_custom_call.1} parent=1 // pred_fallthru
      _
    // Predicated region
    $region6: #{tpu_custom_call.1} parent=1 // pred_check
      _
    $region7: #{tpu_custom_call.1} parent=1 // pred_check_branch
      %19 = sbr.rel (0) target = $region9
    $region8: #{tpu_custom_call.1} parent=1 // pred_region
      _
    $region9: #{tpu_custom_call.1} parent=1 // pred_fallthru
      _
    // Predicated region
    $region10: #{tpu_custom_call.1} parent=1 // pred_check
      _
    $region11: #{tpu_custom_call.1} parent=1 // pred_check_branch
      %21 = sbr.rel (0) target = $region13
    $region12: #{tpu_custom_call.1} parent=1 // pred_region
      _
    $region13: #{tpu_custom_call.1} parent=1 // pred_fallthru
      _
    // Predicated region
    $region14: #{tpu_custom_call.1} parent=1 // pred_check
      _
    $region15: #{tpu_custom_call.1} parent=1 // pred_check_branch
      %23 = sbr.rel (0) target = $region17
    $region16: #{tpu_custom_call.1} parent=1 // pred_region
      _
    $region17: #{tpu_custom_call.1} parent=1 // pred_fallthru
      _
    // Predicated region
    $region18: #{tpu_custom_call.1} parent=1 // pred_check
      _
    $region19: #{tpu_custom_call.1} parent=1 // pred_check_branch
      %25 = sbr.rel (0) target = $region21
    $region20: #{tpu_custom_call.1} parent=1 // pred_region
      _
    $region21: #{tpu_custom_call.1} parent=1 // pred_fallthru
      _
    // Predicated region
    $region22: #{tpu_custom_call.1} parent=1 // pred_check
      _
    $region23: #{tpu_custom_call.1} parent=1 // pred_check_branch
      %27 = sbr.rel (0) target = $region25
    $region24: #{tpu_custom_call.1} parent=1 // pred_region
      _
    $region25: #{tpu_custom_call.1} parent=1 // pred_fallthru
      _
    // Predicated region
    $region26: #{tpu_custom_call.1} parent=1 // pred_check
      _
    $region27: #{tpu_custom_call.1} parent=1 // pred_check_branch
      %29 = sbr.rel (0) target = $region29
    $region28: #{tpu_custom_call.1} parent=1 // pred_region
      _
    $region29: #{tpu_custom_call.1} parent=1 // pred_fallthru
      _
    // Predicated region
    $region30: #{tpu_custom_call.1} parent=1 // pred_check
      _
    $region31: #{tpu_custom_call.1} parent=1 // pred_check_branch
      %31 = sbr.rel (0) target = $region33
    $region32: #{tpu_custom_call.1} parent=1 // pred_region
      _
    $region33: #{tpu_custom_call.1} parent=1 // pred_fallthru
      _
    // Predicated region
    $region34: #{tpu_custom_call.1} parent=1 // pred_check
      _
    $region35: #{tpu_custom_call.1} parent=1 // pred_check_branch
      %33 = sbr.rel (0) target = $region37
    $region36: #{tpu_custom_call.1} parent=1 // pred_region
      _
    $region37: #{tpu_custom_call.1} parent=1 // pred_fallthru
      _
    // Predicated region
    $region38: #{tpu_custom_call.1} parent=1 // pred_check
      _
    $region39: #{tpu_custom_call.1} parent=1 // pred_check_branch
      %35 = sbr.rel (0) target = $region41
    $region40: #{tpu_custom_call.1} parent=1 // pred_region
      _
    $region41: #{tpu_custom_call.1} parent=1 // pred_fallthru
      _
    %v36 = vld [vmem:[%s0] sm:$0xff]
    %v37 = vld [vmem:[%s0 + $0x8] sm:$0xff]
    %v38 = vld [vmem:[%s1] sm:$0xff]
    %40 = vset.pattern.permute.xlu0 0
    %41 = vperm.xlu0 %40, %v38
    %v42 = vpop.permute.xlu0 %41
    %v44 = vmul.f32 %v36, %v42
    %v45 = vmul.f32 %v37, %v42
    %v46 = vld [vmem:[%s2] sm:$0xff]
    %48 = vset.pattern.permute.xlu0 0
    %49 = vperm.xlu0 %48, %v46
    %v50 = vpop.permute.xlu0 %49
    %v52 = vadd.f32 %v44, %v50
    %v53 = vadd.f32 %v45, %v50
    %v54 = vmax.f32 %v52, 0.0
    %v55 = vmax.f32 %v53, 0.0
    %v56 = vld [vmem:[%s3] sm:$0xff]
    %v57 = vld [vmem:[%s3 + $0x8] sm:$0xff]
    %vm58 = vcmask 64512
    %v60 = vsel %vm58, %v56, 0
    %v63 = vsel %vm58, %v57, 0
    %65 = vmatprep.subr.mxu0 0.0
    %66 = vmatpush1.msra.mxu0 0.0
    %67 = vmatprep.subr.mxu0 0.0
    %68 = vmatpush1.msra.mxu0 0.0
    %69 = vmatprep.subr.mxu0 0.0
    %70 = vmatpush1.msra.mxu0 0.0
    %71 = vmatprep.subr.mxu0 0.0
    %72 = vmatpush1.msra.mxu0 0.0
    %73 = vmatprep.subr.mxu0 0.0
    %74 = vmatpush1.msra.mxu0 0.0
    %75 = vmatprep.subr.mxu0 0.0
    %76 = vmatpush1.msra.mxu0 0.0
    %77 = vmatprep.subr.mxu0 0.0
    %78 = vmatpush1.msra.mxu0 0.0
    %79 = vmatprep.subr.mxu0 0.0
    %80 = vmatpush1.msra.mxu0 0.0
    %81 = vmatprep.subr.mxu0 0.0
    %82 = vmatpush1.msra.mxu0 0.0
    %83 = vmatprep.subr.mxu0 0.0
    %84 = vmatpush1.msra.mxu0 0.0
    %85 = vmatprep.subr.mxu0 0.0
    %86 = vmatpush1.msra.mxu0 0.0
    %87 = vmatprep.subr.mxu0 0.0
    %88 = vmatpush1.msra.mxu0 0.0
    %89 = vmatprep.subr.mxu0 0.0
    %90 = vmatpush1.msra.mxu0 0.0
    %91 = vmatprep.subr.mxu0 0.0
    %92 = vmatpush1.msra.mxu0 0.0
    %93 = vmatprep.subr.mxu0 0.0
    %94 = vmatpush1.msra.mxu0 0.0
    %95 = vmatprep.subr.mxu0 %v55
    %96 = vmatpush1.msra.mxu0 %v54
    %97 = vmatprep.subr.mxu0 0.0
    %98 = vmatpush2.msra.mxu0 0.0
    %99 = vmatprep.subr.mxu0 0.0
    %100 = vmatpush2.msra.mxu0 0.0
    %101 = vmatprep.subr.mxu0 0.0
    %102 = vmatpush2.msra.mxu0 0.0
    %103 = vmatprep.subr.mxu0 0.0
    %104 = vmatpush2.msra.mxu0 0.0
    %105 = vmatprep.subr.mxu0 0.0
    %106 = vmatpush2.msra.mxu0 0.0
    %107 = vmatprep.subr.mxu0 0.0
    %108 = vmatpush2.msra.mxu0 0.0
    %109 = vmatprep.subr.mxu0 0.0
    %110 = vmatpush2.msra.mxu0 0.0
    %111 = vmatprep.subr.mxu0 0.0
    %112 = vmatpush2.msra.mxu0 0.0
    %113 = vmatprep.subr.mxu0 0.0
    %114 = vmatpush2.msra.mxu0 0.0
    %115 = vmatprep.subr.mxu0 0.0
    %116 = vmatpush2.msra.mxu0 0.0
    %117 = vmatprep.subr.mxu0 0.0
    %118 = vmatpush2.msra.mxu0 0.0
    %119 = vmatprep.subr.mxu0 0.0
    %120 = vmatpush2.msra.mxu0 0.0
    %121 = vmatprep.subr.mxu0 0.0
    %122 = vmatpush2.msra.mxu0 0.0
    %123 = vmatprep.subr.mxu0 0.0
    %124 = vmatpush2.msra.mxu0 0.0
    %125 = vmatprep.subr.mxu0 0.0
    %126 = vmatpush2.msra.mxu0 0.0
    %127 = vmatprep.subr.mxu0 0.0
    %128 = vmatpush2.msra.mxu0 0.0
    %129 = vmatprep.mubr.f32.mxu0 0.0
    %130 = vmatmul.mubr.f32.gmra.mxu0 %v60
    %v131 = vpop.f32.mrf.mxu0
    %v132 = vadd.f32 0.0, %v131
    %v133 = vpop.f32.mrf.mxu0
    %v134 = vadd.f32 0.0, %v133
    %135 = vmatprep.mubr.f32.mxu0 0.0
    %136 = vmatmul.mubr.f32.gmra.mxu0 %v63
    %v137 = vpop.f32.mrf.mxu0
    %v138 = vadd.f32 0.0, %v137
    %v139 = vpop.f32.mrf.mxu0
    %v140 = vadd.f32 0.0, %v139
    %141 = vdwg.mxu0
    %v142 = vld [vmem:[%s4] sm:$0xff]
    %v143 = vld [vmem:[%s4 + $0x8] sm:$0xff]
    %v144 = vld [vmem:[%s4 + $0x10] sm:$0xff]
    %v145 = vld [vmem:[%s4 + $0x18] sm:$0xff]
    %v146 = vld [vmem:[%s5] sm:$0xff]
    %v147 = vld [vmem:[%s5 + $0x8] sm:$0xff]
    %v148 = vld [vmem:[%s5 + $0x10] sm:$0xff]
    %v149 = vld [vmem:[%s5 + $0x18] sm:$0xff]
    %151 = vset.pattern.permute.xlu0 0
    %152 = vperm.xlu0 %151, %v146
    %v153 = vpop.permute.xlu0 %152
    %156 = vset.pattern.permute.xlu0 0
    %157 = vperm.xlu0 %156, %v147
    %v158 = vpop.permute.xlu0 %157
    %161 = vset.pattern.permute.xlu0 0
    %162 = vperm.xlu0 %161, %v148
    %v163 = vpop.permute.xlu0 %162
    %166 = vset.pattern.permute.xlu0 0
    %167 = vperm.xlu0 %166, %v149
    %v168 = vpop.permute.xlu0 %167
    %v171 = vsel %vm58, %v142, 0
    %v174 = vsel %vm58, %v143, 0
    %v177 = vsel %vm58, %v144, 0
    %v180 = vsel %vm58, %v145, 0
    %182 = vmatprep.subr.mxu0 0.0
    %183 = vmatpush1.msra.mxu0 0.0
    %184 = vmatprep.subr.mxu0 0.0
    %185 = vmatpush1.msra.mxu0 0.0
    %186 = vmatprep.subr.mxu0 0.0
    %187 = vmatpush1.msra.mxu0 0.0
    %188 = vmatprep.subr.mxu0 0.0
    %189 = vmatpush1.msra.mxu0 0.0
    %190 = vmatprep.subr.mxu0 0.0
    %191 = vmatpush1.msra.mxu0 0.0
    %192 = vmatprep.subr.mxu0 0.0
    %193 = vmatpush1.msra.mxu0 0.0
    %194 = vmatprep.subr.mxu0 0.0
    %195 = vmatpush1.msra.mxu0 0.0
    %196 = vmatprep.subr.mxu0 0.0
    %197 = vmatpush1.msra.mxu0 0.0
    %198 = vmatprep.subr.mxu0 0.0
    %199 = vmatpush1.msra.mxu0 0.0
    %200 = vmatprep.subr.mxu0 0.0
    %201 = vmatpush1.msra.mxu0 0.0
    %202 = vmatprep.subr.mxu0 0.0
    %203 = vmatpush1.msra.mxu0 0.0
    %204 = vmatprep.subr.mxu0 0.0
    %205 = vmatpush1.msra.mxu0 0.0
    %206 = vmatprep.subr.mxu0 0.0
    %207 = vmatpush1.msra.mxu0 0.0
    %208 = vmatprep.subr.mxu0 0.0
    %209 = vmatpush1.msra.mxu0 0.0
    %210 = vmatprep.subr.mxu0 0.0
    %211 = vmatpush1.msra.mxu0 0.0
    %212 = vmatprep.subr.mxu0 %v37
    %213 = vmatpush1.msra.mxu0 %v36
    %214 = vmatprep.subr.mxu0 0.0
    %215 = vmatpush2.msra.mxu0 0.0
    %216 = vmatprep.subr.mxu0 0.0
    %217 = vmatpush2.msra.mxu0 0.0
    %218 = vmatprep.subr.mxu0 0.0
    %219 = vmatpush2.msra.mxu0 0.0
    %220 = vmatprep.subr.mxu0 0.0
    %221 = vmatpush2.msra.mxu0 0.0
    %222 = vmatprep.subr.mxu0 0.0
    %223 = vmatpush2.msra.mxu0 0.0
    %224 = vmatprep.subr.mxu0 0.0
    %225 = vmatpush2.msra.mxu0 0.0
    %226 = vmatprep.subr.mxu0 0.0
    %227 = vmatpush2.msra.mxu0 0.0
    %228 = vmatprep.subr.mxu0 0.0
    %229 = vmatpush2.msra.mxu0 0.0
    %230 = vmatprep.subr.mxu0 0.0
    %231 = vmatpush2.msra.mxu0 0.0
    %232 = vmatprep.subr.mxu0 0.0
    %233 = vmatpush2.msra.mxu0 0.0
    %234 = vmatprep.subr.mxu0 0.0
    %235 = vmatpush2.msra.mxu0 0.0
    %236 = vmatprep.subr.mxu0 0.0
    %237 = vmatpush2.msra.mxu0 0.0
    %238 = vmatprep.subr.mxu0 0.0
    %239 = vmatpush2.msra.mxu0 0.0
    %240 = vmatprep.subr.mxu0 0.0
    %241 = vmatpush2.msra.mxu0 0.0
    %242 = vmatprep.subr.mxu0 0.0
    %243 = vmatpush2.msra.mxu0 0.0
    %244 = vmatprep.subr.mxu0 0.0
    %245 = vmatpush2.msra.mxu0 0.0
    %246 = vmatprep.mubr.f32.mxu0 0.0
    %247 = vmatmul.mubr.f32.gmra.mxu0 %v171
    %v248 = vpop.f32.mrf.mxu0
    %v249 = vadd.f32 %v153, %v248
    %v250 = vpop.f32.mrf.mxu0
    %v251 = vadd.f32 %v153, %v250
    %252 = vmatprep.mubr.f32.mxu0 0.0
    %253 = vmatmul.mubr.f32.gmra.mxu0 %v174
    %v254 = vpop.f32.mrf.mxu0
    %v255 = vadd.f32 %v158, %v254
    %v256 = vpop.f32.mrf.mxu0
    %v257 = vadd.f32 %v158, %v256
    %258 = vmatprep.mubr.f32.mxu0 0.0
    %259 = vmatmul.mubr.f32.gmra.mxu0 %v177
    %v260 = vpop.f32.mrf.mxu0
    %v261 = vadd.f32 %v163, %v260
    %v262 = vpop.f32.mrf.mxu0
    %v263 = vadd.f32 %v163, %v262
    %264 = vmatprep.mubr.f32.mxu0 0.0
    %265 = vmatmul.mubr.f32.gmra.mxu0 %v180
    %v266 = vpop.f32.mrf.mxu0
    %v267 = vadd.f32 %v168, %v266
    %v268 = vpop.f32.mrf.mxu0
    %v269 = vadd.f32 %v168, %v268
    %270 = vdwg.mxu0
    %v271 = vlaneseq
    %v272 = vand.u32 %v271, 127
    %273 = vmax.xlane.f32.xlu0 %v132
    %v274 = vpop.xlane.xlu0 %273
    %275 = vmax.xlane.f32.xlu0 %v138
    %v276 = vpop.xlane.xlu0 %275
    %vm277 = vcmp.eq.s32.totalorder %v272, 0
    %v278 = vsel %vm277, %v274, 0.0
    %v279 = vsel %vm277, %v276, 0.0
    %v280 = vadd.f32 %v278, 0.0
    %v281 = vadd.f32 %v279, 0.0
    %282 = vmax.xlane.f32.xlu0 %v134
    %v283 = vpop.xlane.xlu0 %282
    %284 = vmax.xlane.f32.xlu0 %v140
    %v285 = vpop.xlane.xlu0 %284
    %vm286 = vcmp.eq.s32.totalorder %v272, 1
    %v287 = vsel %vm286, %v283, 0.0
    %v288 = vsel %vm286, %v285, 0.0
    %v289 = vadd.f32 %v280, %v287
    %v290 = vadd.f32 %v281, %v288
    %v291 = vld [vmem:[%s6] sm:$0xff]
    %v292 = vld [vmem:[%s6 + $0x8] sm:$0xff]
    %294 = vset.pattern.permute.xlu0 0
    %295 = vperm.xlu0 %294, %v291
    %v296 = vpop.permute.xlu0 %295
    %299 = vset.pattern.permute.xlu0 0
    %300 = vperm.xlu0 %299, %v292
    %v301 = vpop.permute.xlu0 %300
    %v303 = vmul.f32 %v289, %v296
    %v304 = vmul.f32 %v290, %v301
    %v305 = vld [vmem:[%s7] sm:$0xff]
    %v306 = vld [vmem:[%s7 + $0x8] sm:$0xff]
    %308 = vset.pattern.permute.xlu0 0
    %309 = vperm.xlu0 %308, %v305
    %v310 = vpop.permute.xlu0 %309
    %313 = vset.pattern.permute.xlu0 0
    %314 = vperm.xlu0 %313, %v306
    %v315 = vpop.permute.xlu0 %314
    %v317 = vadd.f32 %v303, %v310
    %v318 = vadd.f32 %v304, %v315
    %v319 = vmax.f32 %v317, 0.0
    %v320 = vmax.f32 %v318, 0.0
    %v321 = vld [vmem:[%s8] sm:$0xff]
    %v322 = vld [vmem:[%s8 + $0x8] sm:$0xff]
    %v323 = vld [vmem:[%s9] sm:$0xff]
    %v324 = vld [vmem:[%s9 + $0x8] sm:$0xff]
    %326 = vset.pattern.permute.xlu0 0
    %327 = vperm.xlu0 %326, %v323
    %v328 = vpop.permute.xlu0 %327
    %331 = vset.pattern.permute.xlu0 0
    %332 = vperm.xlu0 %331, %v324
    %v333 = vpop.permute.xlu0 %332
    %vm335 = vcmask 130048
    %v337 = vsel %vm335, %v321, 0
    %v340 = vsel %vm335, %v322, 0
    %342 = vmatprep.subr.mxu0 0.0
    %343 = vmatpush1.msra.mxu0 0.0
    %344 = vmatprep.subr.mxu0 0.0
    %345 = vmatpush1.msra.mxu0 0.0
    %346 = vmatprep.subr.mxu0 0.0
    %347 = vmatpush1.msra.mxu0 0.0
    %348 = vmatprep.subr.mxu0 0.0
    %349 = vmatpush1.msra.mxu0 0.0
    %350 = vmatprep.subr.mxu0 0.0
    %351 = vmatpush1.msra.mxu0 0.0
    %352 = vmatprep.subr.mxu0 0.0
    %353 = vmatpush1.msra.mxu0 0.0
    %354 = vmatprep.subr.mxu0 0.0
    %355 = vmatpush1.msra.mxu0 0.0
    %356 = vmatprep.subr.mxu0 0.0
    %357 = vmatpush1.msra.mxu0 0.0
    %358 = vmatprep.subr.mxu0 0.0
    %359 = vmatpush1.msra.mxu0 0.0
    %360 = vmatprep.subr.mxu0 0.0
    %361 = vmatpush1.msra.mxu0 0.0
    %362 = vmatprep.subr.mxu0 0.0
    %363 = vmatpush1.msra.mxu0 0.0
    %364 = vmatprep.subr.mxu0 0.0
    %365 = vmatpush1.msra.mxu0 0.0
    %366 = vmatprep.subr.mxu0 0.0
    %367 = vmatpush1.msra.mxu0 0.0
    %368 = vmatprep.subr.mxu0 0.0
    %369 = vmatpush1.msra.mxu0 0.0
    %370 = vmatprep.subr.mxu0 0.0
    %371 = vmatpush1.msra.mxu0 %v320
    %372 = vmatprep.subr.mxu0 0.0
    %373 = vmatpush1.msra.mxu0 %v319
    %374 = vmatprep.subr.mxu0 0.0
    %375 = vmatpush2.msra.mxu0 0.0
    %376 = vmatprep.subr.mxu0 0.0
    %377 = vmatpush2.msra.mxu0 0.0
    %378 = vmatprep.subr.mxu0 0.0
    %379 = vmatpush2.msra.mxu0 0.0
    %380 = vmatprep.subr.mxu0 0.0
    %381 = vmatpush2.msra.mxu0 0.0
    %382 = vmatprep.subr.mxu0 0.0
    %383 = vmatpush2.msra.mxu0 0.0
    %384 = vmatprep.subr.mxu0 0.0
    %385 = vmatpush2.msra.mxu0 0.0
    %386 = vmatprep.subr.mxu0 0.0
    %387 = vmatpush2.msra.mxu0 0.0
    %388 = vmatprep.subr.mxu0 0.0
    %389 = vmatpush2.msra.mxu0 0.0
    %390 = vmatprep.subr.mxu0 0.0
    %391 = vmatpush2.msra.mxu0 0.0
    %392 = vmatprep.subr.mxu0 0.0
    %393 = vmatpush2.msra.mxu0 0.0
    %394 = vmatprep.subr.mxu0 0.0
    %395 = vmatpush2.msra.mxu0 0.0
    %396 = vmatprep.subr.mxu0 0.0
    %397 = vmatpush2.msra.mxu0 0.0
    %398 = vmatprep.subr.mxu0 0.0
    %399 = vmatpush2.msra.mxu0 0.0
    %400 = vmatprep.subr.mxu0 0.0
    %401 = vmatpush2.msra.mxu0 0.0
    %402 = vmatprep.subr.mxu0 0.0
    %403 = vmatpush2.msra.mxu0 0.0
    %404 = vmatprep.subr.mxu0 0.0
    %405 = vmatpush2.msra.mxu0 0.0
    %406 = vmatprep.mubr.f32.mxu0 0.0
    %407 = vmatmul.mubr.f32.gmra.mxu0 %v337
    %v408 = vpop.f32.mrf.mxu0
    %v409 = vadd.f32 %v328, %v408
    %v410 = vpop.f32.mrf.mxu0
    %411 = vmatprep.mubr.f32.mxu0 0.0
    %412 = vmatmul.mubr.f32.gmra.mxu0 %v340
    %v413 = vpop.f32.mrf.mxu0
    %v414 = vadd.f32 %v333, %v413
    %v415 = vpop.f32.mrf.mxu0
    %416 = vdwg.mxu0
    %v417 = vxor.u32 %v409, 2147483648
    %v418 = vxor.u32 %v414, 2147483648
    %v419 = vmul.f32 %v417, 1.442695
    %v420 = vpow.pop %v419
    %v421 = vmul.f32 %v418, 1.442695
    %v422 = vpow.pop %v421
    %v423 = vadd.f32 %v420, 1.0
    %v424 = vadd.f32 %v422, 1.0
    %v425 = vrcp.pop %v423
    %v426 = vmul.f32 1.0, %v425
    %v427 = vrcp.pop %v424
    %v428 = vmul.f32 1.0, %v427
    %v429 = vsel %vm277, %v426, 0.0
    %v430 = vsel %vm277, %v428, 0.0
    %vm431 = vcmask 15360
    %v432 = vsel %vm431, %v429, 0.0
    %433 = vadd.xlane.f32.xlu0 %v432
    %v434 = vpop.xlane.xlu0 %433
    %v435 = vsel %vm431, %v430, 0.0
    %436 = vadd.xlane.f32.xlu0 %v435
    %v437 = vpop.xlane.xlu0 %436
    %v438 = vmul.f32 %v434, %v249
    %v439 = vmul.f32 %v437, %v255
    %v440 = vadd.f32 %v438, %v261
    %v441 = vadd.f32 %v439, %v267
    %442 = vst [vmem:[#allocation2] sm:$0xff] %v440
    %443 = vst [vmem:[#allocation2 + $0x10] sm:$0xff] %v441
    %v444 = vsel %vm286, %v426, 0.0
    %v445 = vsel %vm286, %v428, 0.0
    %v446 = vsel %vm431, %v444, 0.0
    %447 = vadd.xlane.f32.xlu0 %v446
    %v448 = vpop.xlane.xlu0 %447
    %v449 = vsel %vm431, %v445, 0.0
    %450 = vadd.xlane.f32.xlu0 %v449
    %v451 = vpop.xlane.xlu0 %450
    %v452 = vmul.f32 %v448, %v251
    %v453 = vmul.f32 %v451, %v257
    %v454 = vadd.f32 %v452, %v263
    %v455 = vadd.f32 %v453, %v269
    %456 = vst [vmem:[#allocation2 + $0x8] sm:$0xff] %v454
    %457 = vst [vmem:[#allocation2 + $0x18] sm:$0xff] %v455
    // Predicated region
    $region42: #{tpu_custom_call.1} parent=1 // pred_check
      _
    $region43: #{tpu_custom_call.1} parent=1 // pred_check_branch
      %459 = sbr.rel (0) target = $region45
    $region44: #{tpu_custom_call.1} parent=1 // pred_region
      %s461 = ssub.s32 512, 512
      %462 = vsyncadd [#allocation3], %s461
      %s463 = sshll.u32 [#allocation2], 4
      %s464 = int_to_ptr.vmem [resolvable:$true] %s463
      %469 = dma.vmem_to_hbm [thread:$0]  %s464, 512, %s10, [#allocation3], 256, 256, 16
    $region45: #{tpu_custom_call.1} parent=1 // pred_fallthru
      _
    // Predicated region
    $region46: #{tpu_custom_call.1} parent=1 // pred_check
      _
    $region47: #{tpu_custom_call.1} parent=1 // pred_check_branch
      %471 = sbr.rel (0) target = $region49
    $region48: #{tpu_custom_call.1} parent=1 // pred_region
      %472 = dma.done [#allocation3], 512
    $region49: #{tpu_custom_call.1} parent=1 // pred_fallthru
      _
    %473 = vsyncpa [#allocation3], 1

</llo_original>
